<compile_context>
chip_gen: v7x
topology: tpu7x:2x2x1
jax: 0.10.0
libtpu: 0.0.40
codegen_flags: <defaults>
</compile_context>

<pallas_src>
import jax
import jax.numpy as jnp
from jax.experimental import pallas as pl
from jax.experimental.pallas import tpu as pltpu

IN_FEATURES = 512           # fixed by nn.Linear(512, class_num)
_DEFAULT_BLOCK_B = 2048     # batch-tile cap (rows); ~17 MiB double-buffered f32 inputs
_SMALL_BATCH = 64           # at/below this, one full block (splitting only adds overhead)
_NEG_BIG = float(jnp.finfo(jnp.float32).min)


def _round_up(x, m):
    return (x + m - 1) // m * m


def _two_stream_kernel(x_ref, y_ref, w_ref, b_ref, o_ref):
    # Elementwise product + ReLU on the VPU, in the streams' dtype (bf16 OK).
    h = jnp.maximum(x_ref[...] * y_ref[...], 0)
    # Linear layer on the MXU; always accumulate in f32.
    logits = jnp.dot(h, w_ref[...], preferred_element_type=jnp.float32)
    logits = logits + b_ref[...].astype(jnp.float32)
    # Numerically stable (max-shifted) log-softmax over the class axis, in f32.
    m = jnp.max(logits, axis=1, keepdims=True)
    shifted = logits - m
    lse = jnp.log(jnp.sum(jnp.exp(shifted), axis=1, keepdims=True))
    o_ref[...] = (shifted - lse).astype(o_ref.dtype)


def _pick_batch_tile(B, block_b):
    """Rows per grid step.

    Multiple of 16 (bf16-safe sublane tiling); >= 2 steps (even count) once
    B > _SMALL_BATCH so both v7x TensorCores stream concurrently.
    """
    if B <= _SMALL_BATCH:
        return B                       # single block covering the full array
    n_steps = max(2, pl.cdiv(B, block_b))
    if n_steps % 2:
        n_steps += 1                   # even step count -> balanced megacore split
    return _round_up(pl.cdiv(B, n_steps), 16)


def two_stream_net(out, out2, weight_t, bias, *, block_b=_DEFAULT_BLOCK_B,
                   lane_dense_output=False):
    """TwoStreamNet.forward.

    out, out2 : (B, 512) activation streams (float32 or bfloat16).
    weight_t  : (512, C)  -- nn.Linear(512, C) weight, pre-transposed.
    bias      : (C,) or (1, C).
    Returns (B, C) float32 log-probabilities.
    """
    B, F = out.shape
    assert F == IN_FEATURES, f"expected {IN_FEATURES} input features, got {F}"
    assert out2.shape == (B, F)
    C = weight_t.shape[1]
    bias2d = jnp.asarray(bias).reshape(1, C)

    # Optional lane-dense output: pad C to a multiple of 128.  Zero weight
    # columns + very-negative bias keep the valid-lane log-softmax exact.
    c_out = C
    if lane_dense_output and C % 128 != 0:
        c_out = _round_up(C, 128)
        weight_t = jnp.pad(weight_t, ((0, 0), (0, c_out - C)))
        bias2d = jnp.pad(bias2d, ((0, 0), (0, c_out - C)), constant_values=_NEG_BIG)

    tb = _pick_batch_tile(B, block_b)
    grid = (pl.cdiv(B, tb),)

    in_itemsize = jnp.dtype(out.dtype).itemsize
    w_itemsize = jnp.dtype(weight_t.dtype).itemsize

    # Layout-aware VMEM budget: lanes round up to 128, sublanes to the dtype tile.
    sub = 8 * max(1, 4 // in_itemsize)             # 8 (f32) / 16 (bf16) / 32 (int8)
    tb_pad = _round_up(tb, sub)
    lanes_c = _round_up(c_out, 128)
    vmem_need = (2 * 2 * tb_pad * F * in_itemsize          # two streams, double-buffered
                 + 2 * _round_up(tb, 8) * lanes_c * 4      # f32 output, double-buffered
                 + 2 * F * lanes_c * w_itemsize            # resident weight (2 bufs)
                 + 2 * 8 * 128 * 4)                        # bias tile
    vmem_limit = int(min(max(1.5 * vmem_need, 32 * 2**20), 64 * 2**20))
    # TODO(synk): once pl.Buffered(1) on constant-index blocks is validated on this
    # jax build, pin weight/bias to a single buffer and raise input buffering to 3.

    cost = pl.CostEstimate(
        flops=2 * B * F * c_out + 3 * B * F,               # matmul + mul/relu
        transcendentals=B * (c_out + 1),                   # exp per logit + log per row
        bytes_accessed=(2 * B * F * in_itemsize            # two input streams
                        + B * c_out * 4                    # output
                        + F * c_out * w_itemsize + c_out * 4))

    vmem = pltpu.MemorySpace.VMEM
    result = pl.pallas_call(
        _two_stream_kernel,
        out_shape=jax.ShapeDtypeStruct((B, c_out), jnp.float32),
        grid=grid,
        in_specs=[
            pl.BlockSpec((tb, F), lambda i: (i, 0), memory_space=vmem),
            pl.BlockSpec((tb, F), lambda i: (i, 0), memory_space=vmem),
            pl.BlockSpec((F, c_out), lambda i: (0, 0), memory_space=vmem),  # resident weight
            pl.BlockSpec((1, c_out), lambda i: (0, 0), memory_space=vmem),  # resident bias
        ],
        out_specs=pl.BlockSpec((tb, c_out), lambda i: (i, 0), memory_space=vmem),
        compiler_params=pltpu.CompilerParams(
            dimension_semantics=("parallel",),
            vmem_limit_bytes=vmem_limit,
        ),
        cost_estimate=cost,
    )(out, out2, weight_t, bias2d)

    return result[:, :C] if c_out != C else result


if __name__ == "__main__":
    key = jax.random.PRNGKey(0)
    k_x1, k_y1, k_x2, k_y2, k_w, k_b = jax.random.split(key, 6)

    class_num = 16

    # Deterministic Linear(512, class_num) parameters, stored pre-transposed.
    bound = 1.0 / (IN_FEATURES ** 0.5)
    weight_t = jax.random.uniform(
        k_w, (IN_FEATURES, class_num), minval=-bound, maxval=bound, dtype=jnp.float32)
    bias = jax.random.uniform(
        k_b, (class_num,), minval=-bound, maxval=bound, dtype=jnp.float32)

    def ref_fn(a, b):
        h = jnp.maximum(a.astype(jnp.float32) * b.astype(jnp.float32), 0.0)
        return jax.nn.log_softmax(h @ weight_t + bias[None, :], axis=1)

    # Case 1: tiny batch -> single full block (grid of 1).
    x1 = jax.random.normal(k_x1, (8, IN_FEATURES), dtype=jnp.float32)
    y1 = jax.random.normal(k_y1, (8, IN_FEATURES), dtype=jnp.float32)
    r1 = two_stream_net(x1, y1, weight_t, bias)
    jax.block_until_ready(r1)
    assert r1.shape == (8, class_num)
    assert jnp.allclose(r1, ref_fn(x1, y1), atol=1e-5, rtol=1e-5), "case 1 mismatch"

    # Case 2: B=72 -> two grid steps with a ragged final block (no wrapper jnp.pad).
    x2 = jax.random.normal(k_x2, (72, IN_FEATURES), dtype=jnp.float32)
    y2 = jax.random.normal(k_y2, (72, IN_FEATURES), dtype=jnp.float32)
    r2 = two_stream_net(x2, y2, weight_t, bias)
    jax.block_until_ready(r2)
    assert r2.shape == (72, class_num)
    assert jnp.allclose(r2, ref_fn(x2, y2), atol=1e-5, rtol=1e-5), "case 2 mismatch"

    # Case 3: bf16 input streams (half HBM read traffic); mul/ReLU run in bf16,
    # matmul/log-softmax stay f32 -> loosened tolerance.
    x3 = x2.astype(jnp.bfloat16)
    y3 = y2.astype(jnp.bfloat16)
    r3 = two_stream_net(x3, y3, weight_t, bias)
    jax.block_until_ready(r3)
    assert jnp.allclose(r3, ref_fn(x3, y3), atol=5e-2), "case 3 mismatch"

    # Case 4: lane-dense output path (C padded to 128 in-kernel, sliced here).
    r4 = two_stream_net(x2, y2, weight_t, bias, lane_dense_output=True)
    jax.block_until_ready(r4)
    assert r4.shape == (72, class_num)
    assert jnp.allclose(r4, ref_fn(x2, y2), atol=1e-5, rtol=1e-5), "case 4 mismatch"

    print("KERNEL_OK")
</pallas_src>

<mosaic_0001>
module attributes {stable_mosaic.version = 11 : i64} {
  func.func @_two_stream_kernel(%arg0: i32, %arg1: memref<8x512xf32, #tpu.memory_space<vmem>>, %arg2: memref<8x512xf32, #tpu.memory_space<vmem>>, %arg3: memref<512x16xf32, #tpu.memory_space<vmem>>, %arg4: memref<1x16xf32, #tpu.memory_space<vmem>>, %arg5: memref<8x16xf32, #tpu.memory_space<vmem>>) attributes {dimension_semantics = [#tpu.dimension_semantics<parallel>], iteration_bounds = array<i64: 1>, scalar_prefetch = 0 : i64, scratch_operands = 0 : i64, tpu.core_type = #tpu.core_type<tc>, window_params = [{transform_indices = @transform_0, window_bounds = array<i64: 8, 512>}, {transform_indices = @transform_1, window_bounds = array<i64: 8, 512>}, {pipeline_mode = #tpu.pipeline_mode<synchronous>, transform_indices = @transform_2, window_bounds = array<i64: 512, 16>}, {pipeline_mode = #tpu.pipeline_mode<synchronous>, transform_indices = @transform_3, window_bounds = array<i64: 1, 16>}, {transform_indices = @transform_4, window_bounds = array<i64: 8, 16>}]} {
    %c0 = arith.constant 0 : index
    %c0_0 = arith.constant 0 : index
    %0 = vector.load %arg1[%c0, %c0_0] : memref<8x512xf32, #tpu.memory_space<vmem>>, vector<8x512xf32>
    %c0_1 = arith.constant 0 : index
    %c0_2 = arith.constant 0 : index
    %1 = vector.load %arg2[%c0_1, %c0_2] : memref<8x512xf32, #tpu.memory_space<vmem>>, vector<8x512xf32>
    %2 = arith.mulf %0, %1 : vector<8x512xf32>
    %cst = arith.constant 0.000000e+00 : f32
    %3 = vector.broadcast %cst : f32 to vector<8x512xf32>
    %4 = arith.maximumf %2, %3 : vector<8x512xf32>
    %c0_3 = arith.constant 0 : index
    %c0_4 = arith.constant 0 : index
    %5 = vector.load %arg3[%c0_3, %c0_4] : memref<512x16xf32, #tpu.memory_space<vmem>>, vector<512x16xf32>
    %cst_5 = arith.constant dense<0.000000e+00> : vector<8x16xf32>
    %6 = tpu.matmul %4, %5, %cst_5 {dimension_numbers = #tpu.dot_dimension_numbers<[1], [0], [0], [1], [0, 0, 1, 1], [], []>} : vector<8x512xf32>, vector<512x16xf32>, vector<8x16xf32> -> vector<8x16xf32>
    %c0_6 = arith.constant 0 : index
    %c0_7 = arith.constant 0 : index
    %7 = vector.load %arg4[%c0_6, %c0_7] : memref<1x16xf32, #tpu.memory_space<vmem>>, vector<1x16xf32>
    %8 = vector.broadcast %7 : vector<1x16xf32> to vector<8x16xf32>
    %9 = arith.addf %6, %8 : vector<8x16xf32>
    %cst_8 = arith.constant dense<0xFF800000> : vector<8xf32>
    %10 = vector.multi_reduction <maximumf>, %9, %cst_8 [1] : vector<8x16xf32> to vector<8xf32>
    %11 = vector.shape_cast %10 : vector<8xf32> to vector<8x1xf32>
    %12 = vector.broadcast %11 : vector<8x1xf32> to vector<8x16xf32>
    %13 = arith.subf %9, %12 : vector<8x16xf32>
    %14 = math.exp %13 : vector<8x16xf32>
    %cst_9 = arith.constant dense<0.000000e+00> : vector<8xf32>
    %15 = vector.multi_reduction <add>, %14, %cst_9 [1] : vector<8x16xf32> to vector<8xf32>
    %16 = vector.shape_cast %15 : vector<8xf32> to vector<8x1xf32>
    %17 = math.log %16 : vector<8x1xf32>
    %18 = vector.broadcast %17 : vector<8x1xf32> to vector<8x16xf32>
    %19 = arith.subf %13, %18 : vector<8x16xf32>
    %c0_10 = arith.constant 0 : index
    %c0_11 = arith.constant 0 : index
    %20 = vector.load %arg5[%c0_10, %c0_11] : memref<8x16xf32, #tpu.memory_space<vmem>>, vector<8x16xf32>
    tpu.vector_store %arg5[%c0_10, %c0_11], %19 {strides = array<i32>} : memref<8x16xf32, #tpu.memory_space<vmem>>, vector<8x16xf32>,
    return
  }
  func.func @transform_0(%arg0: i32) -> (i32, i32) {
    %c0_i32 = arith.constant 0 : i32
    %c0_i32_0 = arith.constant 0 : i32
    return %arg0, %c0_i32 : i32, i32
  }
  func.func @transform_1(%arg0: i32) -> (i32, i32) {
    %c0_i32 = arith.constant 0 : i32
    %c0_i32_0 = arith.constant 0 : i32
    return %arg0, %c0_i32 : i32, i32
  }
  func.func @transform_2(%arg0: i32) -> (i32, i32) {
    %c0_i32 = arith.constant 0 : i32
    %c0_i32_0 = arith.constant 0 : i32
    %c0_i32_1 = arith.constant 0 : i32
    return %c0_i32, %c0_i32_0 : i32, i32
  }
  func.func @transform_3(%arg0: i32) -> (i32, i32) {
    %c0_i32 = arith.constant 0 : i32
    %c0_i32_0 = arith.constant 0 : i32
    %c0_i32_1 = arith.constant 0 : i32
    return %c0_i32, %c0_i32_0 : i32, i32
  }
  func.func @transform_4(%arg0: i32) -> (i32, i32) {
    %c0_i32 = arith.constant 0 : i32
    %c0_i32_0 = arith.constant 0 : i32
    return %arg0, %c0_i32 : i32, i32
  }
}

</mosaic_0001>

<llo_original>
// kernel: tpu_custom_call.1
$region0: #{tpu_custom_call.1}
  #allocation0 [shape = 'u32[]', space=smem, size = 0x4, offset = 0x4, fixed_abs, tag = 'smem constant byte address 0x4 - core index']
  #allocation1 [shape = 'u32[144,128]{1,0:T(1,128)}', space=vmem, size = 0x12000, scoped, tag = 'internal scratch']
  %s0 = inlined_call_operand.vmem [shape: f32[8,512], index: 0, kind: input, shape index: {}]
  %s1 = inlined_call_operand.vmem [shape: f32[8,512], index: 1, kind: input, shape index: {}]
  %s2 = inlined_call_operand.vmem [shape: f32[512,16], index: 2, kind: input, shape index: {}]
  %s3 = inlined_call_operand.vmem [shape: f32[1,16], index: 3, kind: input, shape index: {}]
  %s4 = inlined_call_operand.hbm [shape: f32[8,16], index: 4, kind: output, shape index: {}]
  %s5 = sld [smem:[#allocation0]]
  $region26: #{tpu_custom_call.1} parent=0
    _
  %s7 = ssub.s32 1, %s5
  %s8 = scalar_select 0, %s7, %s5
  $region1: #{tpu_custom_call.1} parent=0
    #allocation2 [shape = 'u8[4096]{0}', space=vmem, size = 0x1000, scoped, tag = 'output window, operand 0, single buffered']
    #allocation3 [shape = 's32[1]{0}', space=sflag, size = 0x4, scoped, tag = 'scoped memory for tpu_custom_call.1']
    %9 = vsyncpa [#allocation3], 0
    // Predicated region
    $region2: #{tpu_custom_call.1} parent=1 // pred_check
      _
    $region3: #{tpu_custom_call.1} parent=1 // pred_check_branch
      %11 = sbr.rel (0) target = $region5
    $region4: #{tpu_custom_call.1} parent=1 // pred_region
      _
    $region5: #{tpu_custom_call.1} parent=1 // pred_fallthru
      _
    // Predicated region
    $region6: #{tpu_custom_call.1} parent=1 // pred_check
      _
    $region7: #{tpu_custom_call.1} parent=1 // pred_check_branch
      %13 = sbr.rel (0) target = $region9
    $region8: #{tpu_custom_call.1} parent=1 // pred_region
      _
    $region9: #{tpu_custom_call.1} parent=1 // pred_fallthru
      _
    // Predicated region
    $region10: #{tpu_custom_call.1} parent=1 // pred_check
      _
    $region11: #{tpu_custom_call.1} parent=1 // pred_check_branch
      %15 = sbr.rel (0) target = $region13
    $region12: #{tpu_custom_call.1} parent=1 // pred_region
      _
    $region13: #{tpu_custom_call.1} parent=1 // pred_fallthru
      _
    // Predicated region
    $region14: #{tpu_custom_call.1} parent=1 // pred_check
      _
    $region15: #{tpu_custom_call.1} parent=1 // pred_check_branch
      %17 = sbr.rel (0) target = $region17
    $region16: #{tpu_custom_call.1} parent=1 // pred_region
      _
    $region17: #{tpu_custom_call.1} parent=1 // pred_fallthru
      _
    %v18 = vld [vmem:[%s0] sm:$0xff]
    %v19 = vld [vmem:[%s0 + $0x8] sm:$0xff]
    %v20 = vld [vmem:[%s0 + $0x10] sm:$0xff]
    %v21 = vld [vmem:[%s0 + $0x18] sm:$0xff]
    %v22 = vld [vmem:[%s1] sm:$0xff]
    %v23 = vld [vmem:[%s1 + $0x8] sm:$0xff]
    %v24 = vld [vmem:[%s1 + $0x10] sm:$0xff]
    %v25 = vld [vmem:[%s1 + $0x18] sm:$0xff]
    %v26 = vmul.f32 %v18, %v22
    %v27 = vmul.f32 %v19, %v23
    %v28 = vmul.f32 %v20, %v24
    %v29 = vmul.f32 %v21, %v25
    %v30 = vmax.f32 %v26, 0.0
    %v31 = vmax.f32 %v27, 0.0
    %v32 = vmax.f32 %v28, 0.0
    %v33 = vmax.f32 %v29, 0.0
    %v34 = vld [vmem:[%s2] sm:$0xff]
    %v35 = vld [vmem:[%s2 + $0x8] sm:$0xff]
    %v36 = vld [vmem:[%s2 + $0x10] sm:$0xff]
    %v37 = vld [vmem:[%s2 + $0x18] sm:$0xff]
    %v38 = vld [vmem:[%s2 + $0x20] sm:$0xff]
    %v39 = vld [vmem:[%s2 + $0x28] sm:$0xff]
    %v40 = vld [vmem:[%s2 + $0x30] sm:$0xff]
    %v41 = vld [vmem:[%s2 + $0x38] sm:$0xff]
    %v42 = vld [vmem:[%s2 + $0x40] sm:$0xff]
    %v43 = vld [vmem:[%s2 + $0x48] sm:$0xff]
    %v44 = vld [vmem:[%s2 + $0x50] sm:$0xff]
    %v45 = vld [vmem:[%s2 + $0x58] sm:$0xff]
    %v46 = vld [vmem:[%s2 + $0x60] sm:$0xff]
    %v47 = vld [vmem:[%s2 + $0x68] sm:$0xff]
    %v48 = vld [vmem:[%s2 + $0x70] sm:$0xff]
    %v49 = vld [vmem:[%s2 + $0x78] sm:$0xff]
    %v50 = vld [vmem:[%s2 + $0x80] sm:$0xff]
    %v51 = vld [vmem:[%s2 + $0x88] sm:$0xff]
    %v52 = vld [vmem:[%s2 + $0x90] sm:$0xff]
    %v53 = vld [vmem:[%s2 + $0x98] sm:$0xff]
    %v54 = vld [vmem:[%s2 + $0xa0] sm:$0xff]
    %v55 = vld [vmem:[%s2 + $0xa8] sm:$0xff]
    %v56 = vld [vmem:[%s2 + $0xb0] sm:$0xff]
    %v57 = vld [vmem:[%s2 + $0xb8] sm:$0xff]
    %v58 = vld [vmem:[%s2 + $0xc0] sm:$0xff]
    %v59 = vld [vmem:[%s2 + $0xc8] sm:$0xff]
    %v60 = vld [vmem:[%s2 + $0xd0] sm:$0xff]
    %v61 = vld [vmem:[%s2 + $0xd8] sm:$0xff]
    %v62 = vld [vmem:[%s2 + $0xe0] sm:$0xff]
    %v63 = vld [vmem:[%s2 + $0xe8] sm:$0xff]
    %v64 = vld [vmem:[%s2 + $0xf0] sm:$0xff]
    %v65 = vld [vmem:[%s2 + $0xf8] sm:$0xff]
    %v66 = vld [vmem:[%s2 + $0x100] sm:$0xff]
    %v67 = vld [vmem:[%s2 + $0x108] sm:$0xff]
    %v68 = vld [vmem:[%s2 + $0x110] sm:$0xff]
    %v69 = vld [vmem:[%s2 + $0x118] sm:$0xff]
    %v70 = vld [vmem:[%s2 + $0x120] sm:$0xff]
    %v71 = vld [vmem:[%s2 + $0x128] sm:$0xff]
    %v72 = vld [vmem:[%s2 + $0x130] sm:$0xff]
    %v73 = vld [vmem:[%s2 + $0x138] sm:$0xff]
    %v74 = vld [vmem:[%s2 + $0x140] sm:$0xff]
    %v75 = vld [vmem:[%s2 + $0x148] sm:$0xff]
    %v76 = vld [vmem:[%s2 + $0x150] sm:$0xff]
    %v77 = vld [vmem:[%s2 + $0x158] sm:$0xff]
    %v78 = vld [vmem:[%s2 + $0x160] sm:$0xff]
    %v79 = vld [vmem:[%s2 + $0x168] sm:$0xff]
    %v80 = vld [vmem:[%s2 + $0x170] sm:$0xff]
    %v81 = vld [vmem:[%s2 + $0x178] sm:$0xff]
    %v82 = vld [vmem:[%s2 + $0x180] sm:$0xff]
    %v83 = vld [vmem:[%s2 + $0x188] sm:$0xff]
    %v84 = vld [vmem:[%s2 + $0x190] sm:$0xff]
    %v85 = vld [vmem:[%s2 + $0x198] sm:$0xff]
    %v86 = vld [vmem:[%s2 + $0x1a0] sm:$0xff]
    %v87 = vld [vmem:[%s2 + $0x1a8] sm:$0xff]
    %v88 = vld [vmem:[%s2 + $0x1b0] sm:$0xff]
    %v89 = vld [vmem:[%s2 + $0x1b8] sm:$0xff]
    %v90 = vld [vmem:[%s2 + $0x1c0] sm:$0xff]
    %v91 = vld [vmem:[%s2 + $0x1c8] sm:$0xff]
    %v92 = vld [vmem:[%s2 + $0x1d0] sm:$0xff]
    %v93 = vld [vmem:[%s2 + $0x1d8] sm:$0xff]
    %v94 = vld [vmem:[%s2 + $0x1e0] sm:$0xff]
    %v95 = vld [vmem:[%s2 + $0x1e8] sm:$0xff]
    %v96 = vld [vmem:[%s2 + $0x1f0] sm:$0xff]
    %v97 = vld [vmem:[%s2 + $0x1f8] sm:$0xff]
    %v98 = vld [vmem:[%s3] sm:$0x1]
    %v100 = vlaneseq
    %v101 = vshrl.u32 %v100, 7
    %v102 = vsub.s32 0, %v101
    %v103 = vrot.slane %v98, %v102
    %105 = vmatprep.subr.mxu0 0.0
    %106 = vmatpush1.msra.mxu0 %v34
    %107 = vmatprep.subr.mxu0 0.0
    %108 = vmatpush1.msra.mxu0 %v35
    %109 = vmatprep.subr.mxu0 0.0
    %110 = vmatpush1.msra.mxu0 %v36
    %111 = vmatprep.subr.mxu0 0.0
    %112 = vmatpush1.msra.mxu0 %v37
    %113 = vmatprep.subr.mxu0 0.0
    %114 = vmatpush1.msra.mxu0 %v38
    %115 = vmatprep.subr.mxu0 0.0
    %116 = vmatpush1.msra.mxu0 %v39
    %117 = vmatprep.subr.mxu0 0.0
    %118 = vmatpush1.msra.mxu0 %v40
    %119 = vmatprep.subr.mxu0 0.0
    %120 = vmatpush1.msra.mxu0 %v41
    %121 = vmatprep.subr.mxu0 0.0
    %122 = vmatpush1.msra.mxu0 %v42
    %123 = vmatprep.subr.mxu0 0.0
    %124 = vmatpush1.msra.mxu0 %v43
    %125 = vmatprep.subr.mxu0 0.0
    %126 = vmatpush1.msra.mxu0 %v44
    %127 = vmatprep.subr.mxu0 0.0
    %128 = vmatpush1.msra.mxu0 %v45
    %129 = vmatprep.subr.mxu0 0.0
    %130 = vmatpush1.msra.mxu0 %v46
    %131 = vmatprep.subr.mxu0 0.0
    %132 = vmatpush1.msra.mxu0 %v47
    %133 = vmatprep.subr.mxu0 0.0
    %134 = vmatpush1.msra.mxu0 %v48
    %135 = vmatprep.subr.mxu0 0.0
    %136 = vmatpush1.msra.mxu0 %v49
    %137 = vmatprep.subr.mxu0 0.0
    %138 = vmatpush1.msra.mxu0 %v50
    %139 = vmatprep.subr.mxu0 0.0
    %140 = vmatpush1.msra.mxu0 %v51
    %141 = vmatprep.subr.mxu0 0.0
    %142 = vmatpush1.msra.mxu0 %v52
    %143 = vmatprep.subr.mxu0 0.0
    %144 = vmatpush1.msra.mxu0 %v53
    %145 = vmatprep.subr.mxu0 0.0
    %146 = vmatpush1.msra.mxu0 %v54
    %147 = vmatprep.subr.mxu0 0.0
    %148 = vmatpush1.msra.mxu0 %v55
    %149 = vmatprep.subr.mxu0 0.0
    %150 = vmatpush1.msra.mxu0 %v56
    %151 = vmatprep.subr.mxu0 0.0
    %152 = vmatpush1.msra.mxu0 %v57
    %153 = vmatprep.subr.mxu0 0.0
    %154 = vmatpush1.msra.mxu0 %v58
    %155 = vmatprep.subr.mxu0 0.0
    %156 = vmatpush1.msra.mxu0 %v59
    %157 = vmatprep.subr.mxu0 0.0
    %158 = vmatpush1.msra.mxu0 %v60
    %159 = vmatprep.subr.mxu0 0.0
    %160 = vmatpush1.msra.mxu0 %v61
    %161 = vmatprep.subr.mxu0 0.0
    %162 = vmatpush1.msra.mxu0 %v62
    %163 = vmatprep.subr.mxu0 0.0
    %164 = vmatpush1.msra.mxu0 %v63
    %165 = vmatprep.subr.mxu0 0.0
    %166 = vmatpush1.msra.mxu0 %v64
    %167 = vmatprep.subr.mxu0 0.0
    %168 = vmatpush1.msra.mxu0 %v65
    %169 = vmatprep.mubr.f32.mxu0 %v31
    %170 = vmatmul.mubr.f32.gmra.mrb[0].mxu0 %v30
    %v171 = vpop.f32.mrb[0].mxu0
    %v172 = vadd.f32 %v103, %v171
    %v173 = vpop.f32.mrb[0].mxu0
    %174 = vdwg.mxu0
    %175 = vmatprep.subr.mxu0 0.0
    %176 = vmatpush1.msra.mxu0 %v66
    %177 = vmatprep.subr.mxu0 0.0
    %178 = vmatpush1.msra.mxu0 %v67
    %179 = vmatprep.subr.mxu0 0.0
    %180 = vmatpush1.msra.mxu0 %v68
    %181 = vmatprep.subr.mxu0 0.0
    %182 = vmatpush1.msra.mxu0 %v69
    %183 = vmatprep.subr.mxu0 0.0
    %184 = vmatpush1.msra.mxu0 %v70
    %185 = vmatprep.subr.mxu0 0.0
    %186 = vmatpush1.msra.mxu0 %v71
    %187 = vmatprep.subr.mxu0 0.0
    %188 = vmatpush1.msra.mxu0 %v72
    %189 = vmatprep.subr.mxu0 0.0
    %190 = vmatpush1.msra.mxu0 %v73
    %191 = vmatprep.subr.mxu0 0.0
    %192 = vmatpush1.msra.mxu0 %v74
    %193 = vmatprep.subr.mxu0 0.0
    %194 = vmatpush1.msra.mxu0 %v75
    %195 = vmatprep.subr.mxu0 0.0
    %196 = vmatpush1.msra.mxu0 %v76
    %197 = vmatprep.subr.mxu0 0.0
    %198 = vmatpush1.msra.mxu0 %v77
    %199 = vmatprep.subr.mxu0 0.0
    %200 = vmatpush1.msra.mxu0 %v78
    %201 = vmatprep.subr.mxu0 0.0
    %202 = vmatpush1.msra.mxu0 %v79
    %203 = vmatprep.subr.mxu0 0.0
    %204 = vmatpush1.msra.mxu0 %v80
    %205 = vmatprep.subr.mxu0 0.0
    %206 = vmatpush1.msra.mxu0 %v81
    %207 = vmatprep.subr.mxu0 0.0
    %208 = vmatpush1.msra.mxu0 %v82
    %209 = vmatprep.subr.mxu0 0.0
    %210 = vmatpush1.msra.mxu0 %v83
    %211 = vmatprep.subr.mxu0 0.0
    %212 = vmatpush1.msra.mxu0 %v84
    %213 = vmatprep.subr.mxu0 0.0
    %214 = vmatpush1.msra.mxu0 %v85
    %215 = vmatprep.subr.mxu0 0.0
    %216 = vmatpush1.msra.mxu0 %v86
    %217 = vmatprep.subr.mxu0 0.0
    %218 = vmatpush1.msra.mxu0 %v87
    %219 = vmatprep.subr.mxu0 0.0
    %220 = vmatpush1.msra.mxu0 %v88
    %221 = vmatprep.subr.mxu0 0.0
    %222 = vmatpush1.msra.mxu0 %v89
    %223 = vmatprep.subr.mxu0 0.0
    %224 = vmatpush1.msra.mxu0 %v90
    %225 = vmatprep.subr.mxu0 0.0
    %226 = vmatpush1.msra.mxu0 %v91
    %227 = vmatprep.subr.mxu0 0.0
    %228 = vmatpush1.msra.mxu0 %v92
    %229 = vmatprep.subr.mxu0 0.0
    %230 = vmatpush1.msra.mxu0 %v93
    %231 = vmatprep.subr.mxu0 0.0
    %232 = vmatpush1.msra.mxu0 %v94
    %233 = vmatprep.subr.mxu0 0.0
    %234 = vmatpush1.msra.mxu0 %v95
    %235 = vmatprep.subr.mxu0 0.0
    %236 = vmatpush1.msra.mxu0 %v96
    %237 = vmatprep.subr.mxu0 0.0
    %238 = vmatpush1.msra.mxu0 %v97
    %239 = vmatprep.mubr.f32.mxu0 %v33
    %240 = vmatmul.mubr.f32.gmra.mrb[0].mxu0 %v32
    %v241 = vpop.f32.mrb[0].mxu0
    %v242 = vadd.f32 %v172, %v241
    %v243 = vpop.f32.mrb[0].mxu0
    %244 = vdwg.mxu0
    %vm245 = vcmask 130048
    %v246 = vsel %vm245, %v242, -inf
    %247 = vmax.xlane.f32.xlu0 %v246
    %v248 = vpop.xlane.xlu0 %247
    %v249 = vsub.f32 %v242, %v248
    %v250 = vmul.f32 %v249, 1.442695
    %v251 = vpow.pop %v250
    %v252 = vsel %vm245, %v251, 0.0
    %253 = vadd.xlane.f32.xlu0 %v252
    %v254 = vpop.xlane.xlu0 %253
    %v255 = vlog2.pop %v254
    %v256 = vmul.f32 %v255, 0.6931472
    %v257 = vsub.f32 %v249, %v256
    %258 = vst.msk [vmem:[#allocation2] sm:$0xff] %vm245, %v257
    // Predicated region
    $region18: #{tpu_custom_call.1} parent=1 // pred_check
      _
    $region19: #{tpu_custom_call.1} parent=1 // pred_check_branch
      %260 = sbr.rel (0) target = $region21
    $region20: #{tpu_custom_call.1} parent=1 // pred_region
      %s262 = ssub.s32 128, 128
      %263 = vsyncadd [#allocation3], %s262
      %s265 = sshll.u32 [#allocation2], 4
      %s266 = int_to_ptr.vmem [resolvable:$true] %s265
      %268 = dma.vmem_to_hbm [thread:$0]  %s266, 128, %s4, [#allocation3]
    $region21: #{tpu_custom_call.1} parent=1 // pred_fallthru
      _
    // Predicated region
    $region22: #{tpu_custom_call.1} parent=1 // pred_check
      _
    $region23: #{tpu_custom_call.1} parent=1 // pred_check_branch
      %270 = sbr.rel (0) target = $region25
    $region24: #{tpu_custom_call.1} parent=1 // pred_region
      %271 = dma.done [#allocation3], 128
    $region25: #{tpu_custom_call.1} parent=1 // pred_fallthru
      _
    %272 = vsyncpa [#allocation3], 1

</llo_original>
